<compile_context>
chip_gen: v6e
topology: v6e:2x2x1
jax: 0.10.0
libtpu: 0.0.40
codegen_flags: <defaults>
</compile_context>

<pallas_src>
import functools

import numpy as np
import jax
import jax.numpy as jnp
from jax.experimental import pallas as pl
from jax.experimental.pallas import tpu as pltpu

SELU_SCALE = 1.0507009873554804934193349852946
SELU_ALPHA = 1.6732632423543772848170429916717
BN_EPS = 1e-5
LANE = 128


def _round_up(v, m):
    return (v + m - 1) // m * m


def _vmem_limit(n_bytes):
    return int(min(max(2 * int(n_bytes) + (8 << 20), 16 << 20), 64 << 20))


# ---------------------------------------------------------------------------
# activations (f32 math, inside the kernels)
# ---------------------------------------------------------------------------
def _apply_act(x, act):
    if act == "selu":
        neg = SELU_ALPHA * (jnp.exp(jnp.minimum(x, 0.0)) - 1.0)
        return SELU_SCALE * jnp.where(x > 0, x, neg)
    if act == "sigmoid":
        return 1.0 / (1.0 + jnp.exp(-x))
    return x


# ---------------------------------------------------------------------------
# Pallas kernels
# ---------------------------------------------------------------------------
def _conv_act_kernel(x_ref, w_ref, o_ref, stack_ref, *,
                     shifts, m_cols, c2, c2p, act):
    """One image per grid step: stacked-K conv GEMM + activation.

    x_ref:     (C2, seg)          one image's pixels (zero lane-padded)
    w_ref:     (Cout, KK*C2p)     flattened packed weights (resident)
    o_ref:     (Cout, m_cols)     lane-dense output columns for this image
    stack_ref: (KK*C2p, m_cols)   VMEM K-stack scratch
    """
    if c2p != c2:
        stack_ref[...] = jnp.zeros(stack_ref.shape, stack_ref.dtype)
    for k, d in enumerate(shifts):
        stack_ref[k * c2p:k * c2p + c2, :] = x_ref[:, d:d + m_cols]
    a = jnp.dot(w_ref[...], stack_ref[...], preferred_element_type=jnp.float32)
    o_ref[...] = _apply_act(a, act).astype(o_ref.dtype)


def _make_conv_bn_kernel(*, shifts, m_cols, seg, n_imgs, count, act,
                         c2, c2p, fuse_final):
    """Channel-split block: stacked-K conv + BatchNorm(batch stats) + act,
    optionally fused with the final 1-channel 4x4 conv (partial sums out)."""
    inv_count = 1.0 / count

    def kernel(*refs):
        if fuse_final:
            (x_ref, w_ref, g_ref, b_ref, mask_ref, fw_ref,
             o_ref, p_ref, stack_ref) = refs
        else:
            x_ref, w_ref, g_ref, b_ref, mask_ref, o_ref, stack_ref = refs
            fw_ref = p_ref = None

        if c2p != c2:
            stack_ref[...] = jnp.zeros(stack_ref.shape, stack_ref.dtype)

        msk = mask_ref[...]
        cblk = o_ref.shape[0]
        s1 = jnp.zeros((cblk, 1), jnp.float32)
        s2 = jnp.zeros((cblk, 1), jnp.float32)

        # pass 1: conv -> raw columns into o_ref, masked sum / sum-of-squares
        for i in range(n_imgs):
            base = i * seg
            for k, d in enumerate(shifts):
                stack_ref[k * c2p:k * c2p + c2, :] = (
                    x_ref[:, base + d:base + d + m_cols])
            a = jnp.dot(w_ref[...], stack_ref[...],
                        preferred_element_type=jnp.float32)
            am = a * msk
            s1 = s1 + jnp.sum(am, axis=1, keepdims=True)
            s2 = s2 + jnp.sum(am * a, axis=1, keepdims=True)
            o_ref[:, i * m_cols:(i + 1) * m_cols] = a.astype(o_ref.dtype)

        mean = s1 * inv_count
        var = s2 * inv_count - mean * mean          # biased (train-mode BN)
        scale = g_ref[...] * jax.lax.rsqrt(var + BN_EPS)
        shift = b_ref[...] - mean * scale

        # pass 2: normalize + activation (+ fused final-conv partials)
        vals = []
        for i in range(n_imgs):
            sl = slice(i * m_cols, (i + 1) * m_cols)
            a = o_ref[:, sl].astype(jnp.float32)
            y = _apply_act(a * scale + shift, act)
            o_ref[:, sl] = y.astype(o_ref.dtype)
            if fuse_final:
                v = jnp.sum(y * fw_ref[...], axis=1, keepdims=True)  # (cblk,1)
                v = jnp.sum(v, axis=0, keepdims=True)                # (1,1)
                vals.append(v)
        if fuse_final:
            prow = jnp.concatenate(
                [jnp.broadcast_to(v, (1, LANE)) for v in vals], axis=1)
            p_ref[...] = jnp.broadcast_to(prow, p_ref.shape)

    return kernel


# ---------------------------------------------------------------------------
# Glue: space-to-depth, weight packing, unpack
# ---------------------------------------------------------------------------
def _space_to_depth(x_cnhw):
    c, n, h, w = x_cnhw.shape
    x = x_cnhw.reshape(c, n, h // 2, 2, w // 2, 2)      # (c, n, h2, py, w2, px)
    x = jnp.transpose(x, (3, 5, 0, 1, 2, 4))            # (py, px, c, n, h2, w2)
    return x.reshape(4 * c, n, h // 2, w // 2)


def _pack_weights(w_oihw, stride, compute_dtype):
    cout, cin, kh, kw = w_oihw.shape
    if stride == 2:
        ky, kx = kh // 2, kw // 2
        w = w_oihw.reshape(cout, cin, ky, 2, kx, 2)     # (co, ci, ky, py, kx, px)
        w = jnp.transpose(w, (2, 4, 0, 3, 5, 1))        # (ky, kx, co, py, px, ci)
        w = w.reshape(ky * kx, cout, 4 * cin)
        kyy, kxx, c2 = ky, kx, 4 * cin
    else:
        assert stride == 1
        w = jnp.transpose(w_oihw, (2, 3, 0, 1)).reshape(kh * kw, cout, cin)
        kyy, kxx, c2 = kh, kw, cin
    c2p = _round_up(c2, 8)                              # aligned K-stack stride
    if c2p != c2:
        w = jnp.pad(w, ((0, 0), (0, 0), (0, c2p - c2)))
    w2d = jnp.transpose(w, (1, 0, 2)).reshape(cout, kyy * kxx * c2p)
    return w2d.astype(compute_dtype), kyy, kxx, c2, c2p


def _unpack_columns(out, cout, n, m_cols, ho, wo, wi):
    out = out.reshape(cout, n, m_cols)
    if m_cols >= ho * wi:
        out = out[:, :, :ho * wi]
    else:
        out = jnp.pad(out, ((0, 0), (0, 0), (0, ho * wi - m_cols)))
    return out.reshape(cout, n, ho, wi)[:, :, :, :wo]


# ---------------------------------------------------------------------------
# Fused layer wrapper
# ---------------------------------------------------------------------------
def conv_block(x_cnhw, w_oihw, *, stride, padding, act, bn=None,
               compute_dtype=jnp.bfloat16, out_dtype=None, final_w=None):
    """Fused Conv2d(bias=False) [+ BatchNorm(batch stats)] [+ activation]
    [+ fused trailing 1-channel conv].  x_cnhw: (Cin, N, H, W).
    Returns (Cout, N, Ho, Wo) in out_dtype, or per-image logits (N,) when
    `final_w` is given."""
    if out_dtype is None:
        out_dtype = compute_dtype
    cout, cin, kh, kw = w_oihw.shape
    if padding:
        x_cnhw = jnp.pad(
            x_cnhw, ((0, 0), (0, 0), (padding, padding), (padding, padding)))
    if stride == 2:
        assert x_cnhw.shape[2] % 2 == 0 and x_cnhw.shape[3] % 2 == 0
        xs = _space_to_depth(x_cnhw)
    else:
        assert stride == 1
        xs = x_cnhw
    w2d, kyy, kxx, c2, c2p = _pack_weights(w_oihw, stride, compute_dtype)

    _, n, hi, wi = xs.shape
    ho, wo = hi - kyy + 1, wi - kxx + 1
    sh = (kyy - 1) * wi + (kxx - 1)                     # largest lane shift
    shifts = tuple(ky * wi + kx for ky in range(kyy) for kx in range(kxx))
    kk = kyy * kxx
    kstack = kk * c2p

    m_cols = _round_up(max(hi * wi - sh, 1), LANE)
    seg = _round_up(max(hi * wi, sh + m_cols), LANE)
    if xs.dtype != compute_dtype:
        xs = xs.astype(compute_dtype)
    x2 = xs.reshape(c2, n, hi * wi)
    x2 = jnp.pad(x2, ((0, 0), (0, 0), (0, seg - hi * wi))).reshape(c2, n * seg)

    csize = jnp.dtype(compute_dtype).itemsize
    osize = jnp.dtype(out_dtype).itemsize

    if bn is None:
        # conv + act, one image per grid step ("parallel" -> 2 TCs on v7x)
        vbytes = (csize * (c2 * seg + cout * kstack + kstack * m_cols)
                  + osize * cout * m_cols)
        out = pl.pallas_call(
            functools.partial(_conv_act_kernel, shifts=shifts, m_cols=m_cols,
                              c2=c2, c2p=c2p, act=act),
            out_shape=jax.ShapeDtypeStruct((cout, n * m_cols), out_dtype),
            grid=(n,),
            in_specs=[pl.BlockSpec((c2, seg), lambda i: (0, i)),
                      pl.BlockSpec((cout, kstack), lambda i: (0, 0))],
            out_specs=pl.BlockSpec((cout, m_cols), lambda i: (0, i)),
            scratch_shapes=[pltpu.VMEM((kstack, m_cols), compute_dtype)],
            compiler_params=pltpu.CompilerParams(
                dimension_semantics=("parallel",),
                vmem_limit_bytes=_vmem_limit(vbytes)),
        )(x2, w2d)
        return _unpack_columns(out, cout, n, m_cols, ho, wo, wi)

    # conv + BN + act, channel-split grid (whole batch resident)
    gamma, beta = bn
    nblk = 2 if (cout % 2 == 0 and (cout // 2) % 8 == 0) else 1
    cblk = cout // nblk
    fuse_final = final_w is not None

    lidx = np.arange(m_cols)
    mask = jnp.asarray(
        (((lidx // wi) < ho) & ((lidx % wi) < wo)).reshape(1, m_cols),
        jnp.float32)

    kernel = _make_conv_bn_kernel(shifts=shifts, m_cols=m_cols, seg=seg,
                                  n_imgs=n, count=float(n * ho * wo), act=act,
                                  c2=c2, c2p=c2p, fuse_final=fuse_final)

    in_specs = [pl.BlockSpec((c2, n * seg), lambda i: (0, 0)),
                pl.BlockSpec((cblk, kstack), lambda i: (i, 0)),
                pl.BlockSpec((cblk, 1), lambda i: (i, 0)),
                pl.BlockSpec((cblk, 1), lambda i: (i, 0)),
                pl.BlockSpec((1, m_cols), lambda i: (0, 0))]
    args = [x2, w2d,
            gamma.reshape(cout, 1).astype(jnp.float32),
            beta.reshape(cout, 1).astype(jnp.float32),
            mask]
    out_shapes = [jax.ShapeDtypeStruct((cout, n * m_cols), out_dtype)]
    out_specs = [pl.BlockSpec((cblk, n * m_cols), lambda i: (i, 0))]

    vbytes = (csize * (c2 * n * seg + cout * kstack + kstack * m_cols)
              + osize * cblk * n * m_cols + 4 * (m_cols + cout))

    if fuse_final:
        assert final_w.shape == (1, cout, ho, wo), (
            "fused final conv needs a 1-channel kernel matching the layer's "
            f"output spatial size, got {final_w.shape} vs (1,{cout},{ho},{wo})")
        cols = (np.arange(ho)[:, None] * wi + np.arange(wo)[None, :]).reshape(-1)
        wmap = jnp.zeros((cout, m_cols), jnp.float32).at[:, cols].set(
            final_w[0].reshape(cout, ho * wo).astype(jnp.float32))
        in_specs.append(pl.BlockSpec((cblk, m_cols), lambda i: (i, 0)))
        args.append(wmap)
        out_shapes.append(
            jax.ShapeDtypeStruct((nblk * 8, n * LANE), jnp.float32))
        out_specs.append(pl.BlockSpec((8, n * LANE), lambda i: (i, 0)))
        vbytes += 4 * (cout * m_cols + 8 * n * LANE)

    results = pl.pallas_call(
        kernel,
        out_shape=tuple(out_shapes) if fuse_final else out_shapes[0],
        grid=(nblk,),
        in_specs=in_specs,
        out_specs=tuple(out_specs) if fuse_final else out_specs[0],
        scratch_shapes=[pltpu.VMEM((kstack, m_cols), compute_dtype)],
        compiler_params=pltpu.CompilerParams(
            dimension_semantics=("parallel",),
            vmem_limit_bytes=_vmem_limit(vbytes)),
    )(*args)

    if fuse_final:
        _, partials = results
        logits = partials.reshape(nblk, 8, n, LANE)[:, 0, :, 0].sum(axis=0)
        return logits                                   # (N,) f32
    return _unpack_columns(results, cout, n, m_cols, ho, wo, wi)


# ---------------------------------------------------------------------------
# Model: parameters + forward
# ---------------------------------------------------------------------------
def _conv_init(key, cout, cin, k):
    fan_in = cin * k * k
    bound = 1.0 / np.sqrt(fan_in)
    return jax.random.uniform(key, (cout, cin, k, k), jnp.float32, -bound, bound)


def init_params(key, ndf=8):
    ks = jax.random.split(key, 6)
    return {
        "conv0_w": _conv_init(ks[0], ndf, 3, 4),
        "l1_w": _conv_init(ks[1], ndf * 2, ndf, 4),
        "l1_g": jnp.ones((ndf * 2,), jnp.float32),
        "l1_b": jnp.zeros((ndf * 2,), jnp.float32),
        "l2_w": _conv_init(ks[2], ndf * 4, ndf * 2, 4),
        "l2_g": jnp.ones((ndf * 4,), jnp.float32),
        "l2_b": jnp.zeros((ndf * 4,), jnp.float32),
        "l3_w": _conv_init(ks[3], ndf * 8, ndf * 4, 6),
        "l3_g": jnp.ones((ndf * 8,), jnp.float32),
        "l3_b": jnp.zeros((ndf * 8,), jnp.float32),
        "l4_w": _conv_init(ks[4], ndf * 16, ndf * 8, 6),
        "l4_g": jnp.ones((ndf * 16,), jnp.float32),
        "l4_b": jnp.zeros((ndf * 16,), jnp.float32),
        "final_w": _conv_init(ks[5], 1, ndf * 16, 4),
    }


def discriminator_forward(params, x_nchw, compute_dtype=jnp.bfloat16):
    n = x_nchw.shape[0]
    h = jnp.transpose(x_nchw, (1, 0, 2, 3)).astype(compute_dtype)  # (C,N,H,W)
    h = conv_block(h, params["conv0_w"], stride=2, padding=1, act="selu",
                   compute_dtype=compute_dtype)
    h = conv_block(h, params["l1_w"], stride=2, padding=1, act="selu",
                   bn=(params["l1_g"], params["l1_b"]),
                   compute_dtype=compute_dtype)
    h = conv_block(h, params["l2_w"], stride=2, padding=1, act="selu",
                   bn=(params["l2_g"], params["l2_b"]),
                   compute_dtype=compute_dtype)
    h = conv_block(h, params["l3_w"], stride=2, padding=0, act="selu",
                   bn=(params["l3_g"], params["l3_b"]),
                   compute_dtype=compute_dtype)
    # l4 + fused final 4x4 conv -> per-image logits
    logits = conv_block(h, params["l4_w"], stride=2, padding=0, act="selu",
                        bn=(params["l4_g"], params["l4_b"]),
                        final_w=params["final_w"],
                        compute_dtype=compute_dtype)
    out = jax.nn.sigmoid(logits.astype(jnp.float32))
    return out.reshape(n, 1, 1, 1)


# ---------------------------------------------------------------------------
# Pure-JAX references (self-check only)
# ---------------------------------------------------------------------------
def _ref_conv(x_cnhw, w_oihw, stride, padding):
    x = jnp.transpose(x_cnhw, (1, 0, 2, 3))
    y = jax.lax.conv_general_dilated(
        x, w_oihw, (stride, stride),
        [(padding, padding), (padding, padding)],
        dimension_numbers=("NCHW", "OIHW", "NCHW"))
    return jnp.transpose(y, (1, 0, 2, 3))


def _ref_bn_selu(y, gamma, beta):
    mean = jnp.mean(y, axis=(1, 2, 3), keepdims=True)
    var = jnp.mean((y - mean) ** 2, axis=(1, 2, 3), keepdims=True)
    yn = (y - mean) * jax.lax.rsqrt(var + BN_EPS)
    yn = yn * gamma.reshape(-1, 1, 1, 1) + beta.reshape(-1, 1, 1, 1)
    return SELU_SCALE * jnp.where(
        yn > 0, yn, SELU_ALPHA * (jnp.exp(jnp.minimum(yn, 0.0)) - 1.0))


def _ref_forward(params, x):
    def conv(x, w, s, p):
        return jax.lax.conv_general_dilated(
            x, w, (s, s), [(p, p), (p, p)],
            dimension_numbers=("NCHW", "OIHW", "NCHW"))

    def selu(x):
        return SELU_SCALE * jnp.where(
            x > 0, x, SELU_ALPHA * (jnp.exp(jnp.minimum(x, 0.0)) - 1.0))

    def bn_selu(y, g, b):
        mean = jnp.mean(y, axis=(0, 2, 3), keepdims=True)
        var = jnp.mean((y - mean) ** 2, axis=(0, 2, 3), keepdims=True)
        yn = (y - mean) * jax.lax.rsqrt(var + BN_EPS)
        yn = yn * g.reshape(1, -1, 1, 1) + b.reshape(1, -1, 1, 1)
        return selu(yn)

    h = selu(conv(x, params["conv0_w"], 2, 1))
    h = bn_selu(conv(h, params["l1_w"], 2, 1), params["l1_g"], params["l1_b"])
    h = bn_selu(conv(h, params["l2_w"], 2, 1), params["l2_g"], params["l2_b"])
    h = bn_selu(conv(h, params["l3_w"], 2, 0), params["l3_g"], params["l3_b"])
    h = bn_selu(conv(h, params["l4_w"], 2, 0), params["l4_g"], params["l4_b"])
    h = conv(h, params["final_w"], 1, 0)
    return jax.nn.sigmoid(h)


if __name__ == "__main__":
    key = jax.random.PRNGKey(0)
    kp, kx, *kc = jax.random.split(key, 10)

    # --- small-shape self-checks of the fused conv kernels (f32 compute) ---
    xa = jax.random.normal(kc[0], (3, 2, 16, 16), jnp.float32)
    wa = _conv_init(kc[1], 8, 3, 4)
    got = conv_block(xa, wa, stride=2, padding=1, act="none",
                     compute_dtype=jnp.float32, out_dtype=jnp.float32)
    assert jnp.allclose(got, _ref_conv(xa, wa, 2, 1), atol=5e-2, rtol=5e-2)

    xb = jax.random.normal(kc[2], (4, 2, 16, 16), jnp.float32)
    wb = _conv_init(kc[3], 8, 4, 6)
    gb = 1.0 + 0.1 * jax.random.normal(kc[4], (8,), jnp.float32)
    bb = 0.1 * jax.random.normal(kc[5], (8,), jnp.float32)
    got = conv_block(xb, wb, stride=2, padding=0, act="selu", bn=(gb, bb),
                     compute_dtype=jnp.float32, out_dtype=jnp.float32)
    assert jnp.allclose(got, _ref_bn_selu(_ref_conv(xb, wb, 2, 0), gb, bb),
                        atol=1e-1, rtol=1e-1)

    xc = jax.random.normal(kc[6], (8, 2, 4, 4), jnp.float32)
    wc = _conv_init(kc[7], 1, 8, 4)
    got = conv_block(xc, wc, stride=1, padding=0, act="none",
                     compute_dtype=jnp.float32, out_dtype=jnp.float32)
    assert jnp.allclose(got, _ref_conv(xc, wc, 1, 0), atol=5e-2, rtol=5e-2)

    # --- full forward.  The architecture (strides / kernel sizes) needs
    # 224x224 spatial input to reach the final 4x4 valid conv; ndf is shrunk
    # from 64 to 8 to keep the example small.
    ndf = 8
    params = init_params(kp, ndf=ndf)
    x = jax.random.normal(kx, (2, 3, 224, 224), jnp.float32)

    # end-to-end check vs pure-JAX reference at f32 compute
    fwd32 = jax.jit(functools.partial(discriminator_forward,
                                      compute_dtype=jnp.float32))
    out32 = jax.block_until_ready(fwd32(params, x))
    ref = jax.block_until_ready(jax.jit(_ref_forward)(params, x))
    assert out32.shape == ref.shape == (2, 1, 1, 1), (out32.shape, ref.shape)
    assert jnp.allclose(out32, ref, atol=5e-3, rtol=5e-3), (out32, ref)

    # production config: bf16 MXU inputs / inter-layer activations
    fwd = jax.jit(discriminator_forward)
    out = jax.block_until_ready(fwd(params, x))
    assert out.shape == (2, 1, 1, 1), out.shape
    assert bool(jnp.all(jnp.isfinite(out)))
    assert bool(jnp.all((out >= 0.0) & (out <= 1.0)))
    print("KERNEL_OK")
</pallas_src>

<mosaic_0001>
module attributes {stable_mosaic.version = 11 : i64} {
  func.func @_conv_act_kernel(%arg0: i32, %arg1: memref<12x256xf32, #tpu.memory_space<vmem>>, %arg2: memref<8x64xf32, #tpu.memory_space<vmem>>, %arg3: memref<8x128xf32, #tpu.memory_space<vmem>>, %arg4: memref<64x128xf32, #tpu.memory_space<vmem>>) attributes {dimension_semantics = [#tpu.dimension_semantics<parallel>], iteration_bounds = array<i64: 2>, scalar_prefetch = 0 : i64, scratch_operands = 1 : i64, tpu.core_type = #tpu.core_type<tc>, window_params = [{transform_indices = @transform_0, window_bounds = array<i64: 12, 256>}, {pipeline_mode = #tpu.pipeline_mode<synchronous>, transform_indices = @transform_1, window_bounds = array<i64: 8, 64>}, {transform_indices = @transform_2, window_bounds = array<i64: 8, 128>}]} {
    %cst = arith.constant 0.000000e+00 : f32
    %0 = vector.broadcast %cst : f32 to vector<64x128xf32>
    %c0 = arith.constant 0 : index
    %c0_0 = arith.constant 0 : index
    %1 = vector.load %arg4[%c0, %c0_0] : memref<64x128xf32, #tpu.memory_space<vmem>>, vector<64x128xf32>
    tpu.vector_store %arg4[%c0, %c0_0], %0 {strides = array<i32>} : memref<64x128xf32, #tpu.memory_space<vmem>>, vector<64x128xf32>,
    %c0_1 = arith.constant 0 : index
    %c0_2 = arith.constant 0 : index
    %2 = vector.load %arg1[%c0_1, %c0_2] : memref<12x256xf32, #tpu.memory_space<vmem>>, vector<12x128xf32>
    %c0_3 = arith.constant 0 : index
    %c0_4 = arith.constant 0 : index
    %3 = vector.load %arg4[%c0_3, %c0_4] : memref<64x128xf32, #tpu.memory_space<vmem>>, vector<12x128xf32>
    tpu.vector_store %arg4[%c0_3, %c0_4], %2 {strides = array<i32>} : memref<64x128xf32, #tpu.memory_space<vmem>>, vector<12x128xf32>,
    %c0_5 = arith.constant 0 : index
    %c1 = arith.constant 1 : index
    %4 = vector.load %arg1[%c0_5, %c1] : memref<12x256xf32, #tpu.memory_space<vmem>>, vector<12x128xf32>
    %c16 = arith.constant 16 : index
    %c0_6 = arith.constant 0 : index
    %5 = vector.load %arg4[%c16, %c0_6] : memref<64x128xf32, #tpu.memory_space<vmem>>, vector<12x128xf32>
    tpu.vector_store %arg4[%c16, %c0_6], %4 {strides = array<i32>} : memref<64x128xf32, #tpu.memory_space<vmem>>, vector<12x128xf32>,
    %c0_7 = arith.constant 0 : index
    %c9 = arith.constant 9 : index
    %6 = vector.load %arg1[%c0_7, %c9] : memref<12x256xf32, #tpu.memory_space<vmem>>, vector<12x128xf32>
    %c32 = arith.constant 32 : index
    %c0_8 = arith.constant 0 : index
    %7 = vector.load %arg4[%c32, %c0_8] : memref<64x128xf32, #tpu.memory_space<vmem>>, vector<12x128xf32>
    tpu.vector_store %arg4[%c32, %c0_8], %6 {strides = array<i32>} : memref<64x128xf32, #tpu.memory_space<vmem>>, vector<12x128xf32>,
    %c0_9 = arith.constant 0 : index
    %c10 = arith.constant 10 : index
    %8 = vector.load %arg1[%c0_9, %c10] : memref<12x256xf32, #tpu.memory_space<vmem>>, vector<12x128xf32>
    %c48 = arith.constant 48 : index
    %c0_10 = arith.constant 0 : index
    %9 = vector.load %arg4[%c48, %c0_10] : memref<64x128xf32, #tpu.memory_space<vmem>>, vector<12x128xf32>
    tpu.vector_store %arg4[%c48, %c0_10], %8 {strides = array<i32>} : memref<64x128xf32, #tpu.memory_space<vmem>>, vector<12x128xf32>,
    %c0_11 = arith.constant 0 : index
    %c0_12 = arith.constant 0 : index
    %10 = vector.load %arg2[%c0_11, %c0_12] : memref<8x64xf32, #tpu.memory_space<vmem>>, vector<8x64xf32>
    %c0_13 = arith.constant 0 : index
    %c0_14 = arith.constant 0 : index
    %11 = vector.load %arg4[%c0_13, %c0_14] : memref<64x128xf32, #tpu.memory_space<vmem>>, vector<64x128xf32>
    %cst_15 = arith.constant dense<0.000000e+00> : vector<8x128xf32>
    %12 = tpu.matmul %10, %11, %cst_15 {dimension_numbers = #tpu.dot_dimension_numbers<[1], [0], [0], [1], [0, 0, 1, 1], [], []>} : vector<8x64xf32>, vector<64x128xf32>, vector<8x128xf32> -> vector<8x128xf32>
    %c0_16 = arith.constant 0 : index
    %c0_17 = arith.constant 0 : index
    %13 = vector.load %arg3[%c0_16, %c0_17] : memref<8x128xf32, #tpu.memory_space<vmem>>, vector<8x128xf32>
    tpu.vector_store %arg3[%c0_16, %c0_17], %12 {strides = array<i32>} : memref<8x128xf32, #tpu.memory_space<vmem>>, vector<8x128xf32>,
    return
  }
  func.func @transform_0(%arg0: i32) -> (i32, i32) {
    %c0_i32 = arith.constant 0 : i32
    %c0_i32_0 = arith.constant 0 : i32
    return %c0_i32, %arg0 : i32, i32
  }
  func.func @transform_1(%arg0: i32) -> (i32, i32) {
    %c0_i32 = arith.constant 0 : i32
    %c0_i32_0 = arith.constant 0 : i32
    %c0_i32_1 = arith.constant 0 : i32
    return %c0_i32, %c0_i32_0 : i32, i32
  }
  func.func @transform_2(%arg0: i32) -> (i32, i32) {
    %c0_i32 = arith.constant 0 : i32
    %c0_i32_0 = arith.constant 0 : i32
    return %c0_i32, %arg0 : i32, i32
  }
}

</mosaic_0001>

<llo_original>
// kernel: tpu_custom_call.1
$region0: #{tpu_custom_call.1}
  #allocation0 [shape = 'u32[]', space=smem, size = 0x4, offset = 0x4, fixed_abs, tag = 'smem constant byte address 0x4 - core index']
  #allocation1 [shape = 'u32[144,128]{1,0:T(1,128)}', space=vmem, size = 0x12000, scoped, tag = 'internal scratch']
  #allocation2 [shape = 'f32[64,128]{1,0:T(8,128)}', space=vmem, size = 0x8000, scoped, tag = 'scratch operand']
  %s0 = inlined_call_operand.hbm [shape: f32[12,512], index: 0, kind: input, shape index: {}]
  %s1 = inlined_call_operand.hbm [shape: f32[8,64], index: 1, kind: input, shape index: {}]
  %s2 = inlined_call_operand.hbm [shape: f32[8,256], index: 2, kind: output, shape index: {}]
  %s3 = sld [smem:[#allocation0]]
  $region49: #{tpu_custom_call.1} parent=0
    _
  %s5 = ssub.s32 1, %s3
  %s6 = scalar_select 0, %s5, %s3
  $region1: #{tpu_custom_call.1} parent=0
    #allocation3 [shape = 'u8[32768]{0}', space=vmem, size = 0x8000, scoped, tag = 'input window, operand 0']
    #allocation4 [shape = 's32[2]{0}', space=sflag, size = 0x8, scoped, tag = 'scoped memory for tpu_custom_call.1']
    #allocation5 [shape = 's32[2]{0}', space=sflag, size = 0x8, scoped, tag = 'scoped memory for tpu_custom_call.1']
    #allocation6 [shape = 'u8[4096]{0}', space=vmem, size = 0x1000, scoped, tag = 'input window, operand 1, single buffered']
    #allocation7 [shape = 's32[1]{0}', space=sflag, size = 0x4, scoped, tag = 'scoped memory for tpu_custom_call.1']
    #allocation8 [shape = 'u8[8192]{0}', space=vmem, size = 0x2000, scoped, tag = 'output window, operand 0']
    %7 = vsyncpa [#allocation4], 0
    %s8 = scalar_lea.sflag [#allocation4], 1
    %9 = vsyncpa %s8, 0
    %10 = vsyncpa [#allocation7], 0
    %11 = vsyncpa [#allocation5], 0
    %s12 = scalar_lea.sflag [#allocation5], 1
    %13 = vsyncpa %s12, 0
    loop: start=0, step=1, limit=4
    $region2: #{tpu_custom_call.1} parent=1 // loop_pre_header
      _
    $region3: #{tpu_custom_call.1} parent=1 // loop_header
      %s15 = sphi 0, %s19
      %p16 = scmp.ge.s32.totalorder %s15, 4
      %s25 = sphi 0, %s27
      %s28 = sphi 0, %s25
      %s29 = sphi 0, %s28
      %s45 = sphi 0, %s29
      %s49 = sphi 0, %s49
      %s51 = sphi 0, %s49
      %s52 = sphi 0, %s51
      %s66 = sphi 0, %s52
      %s72 = sphi 0, %s74
      %s75 = sphi 0, %s72
      %s76 = sphi 0, %s75
      %s92 = sphi 0, %s76
    $region4: #{tpu_custom_call.1} parent=1 // loop_header_branch
      %18 = sbr.rel (%p16) target = $region8
    $region5: #{tpu_custom_call.1} parent=1 // loop_body
      %s20 = ssub.s32 %s15, 1
      %s21 = ssub.s32 %s15, 2
      %s22 = sadd.s32 %s15, 1
      %s23 = ssub.s32 %s15, %s22
      %p24 = scmp.eq.s32.totalorder %s23, 0
      %s26 = sadd.s32 %s25, 1
      %s27 = scalar_select %p24, %s25, %s26
      %p30 = pneg %p24
      %p31 = scmp.eq.s32.totalorder %s15, 1
      %p32 = por %p30, %p31
      %p33 = scmp.ne.s32.totalorder %s25, %s28
      %p34 = scmp.eq.s32.totalorder %s15, 0
      %p35 = por %p33, %p34
      %p36 = scmp.ne.s32.totalorder %s25, %s28
      %p37 = scmp.eq.s32.totalorder %s20, 1
      %p38 = por %p36, %p37
      %p39 = scmp.ne.s32.totalorder %s28, %s29
      %p40 = scmp.eq.s32.totalorder %s20, 0
      %p41 = por %p39, %p40
      %p42 = scmp.ne.s32.totalorder %s28, %s29
      %p43 = scmp.eq.s32.totalorder %s21, 1
      %p44 = por %p42, %p43
      %p46 = scmp.ne.s32.totalorder %s29, %s45
      %p47 = scmp.eq.s32.totalorder %s21, 0
      %p48 = por %p46, %p47
      %s50 = sadd.s32 %s49, 1
      %p53 = scmp.eq.s32.totalorder %s15, 1
      %p54 = scmp.ne.s32.totalorder %s49, %s51
      %p55 = scmp.eq.s32.totalorder %s15, 0
      %p56 = por %p54, %p55
      %p57 = scmp.ne.s32.totalorder %s49, %s51
      %p58 = scmp.eq.s32.totalorder %s20, 1
      %p59 = por %p57, %p58
      %p60 = scmp.ne.s32.totalorder %s51, %s52
      %p61 = scmp.eq.s32.totalorder %s20, 0
      %p62 = por %p60, %p61
      %p63 = scmp.ne.s32.totalorder %s51, %s52
      %p64 = scmp.eq.s32.totalorder %s21, 1
      %p65 = por %p63, %p64
      %p67 = scmp.ne.s32.totalorder %s52, %s66
      %p68 = scmp.eq.s32.totalorder %s21, 0
      %p69 = por %p67, %p68
      %s70 = ssub.s32 %s15, %s22
      %p71 = scmp.eq.s32.totalorder %s70, 0
      %s73 = sadd.s32 %s72, 1
      %s74 = scalar_select %p71, %s72, %s73
      %p77 = pneg %p71
      %p78 = scmp.eq.s32.totalorder %s15, 1
      %p79 = por %p77, %p78
      %p80 = scmp.ne.s32.totalorder %s72, %s75
      %p81 = scmp.eq.s32.totalorder %s15, 0
      %p82 = por %p80, %p81
      %p83 = scmp.ne.s32.totalorder %s72, %s75
      %p84 = scmp.eq.s32.totalorder %s20, 1
      %p85 = por %p83, %p84
      %p86 = scmp.ne.s32.totalorder %s75, %s76
      %p87 = scmp.eq.s32.totalorder %s20, 0
      %p88 = por %p86, %p87
      %p89 = scmp.ne.s32.totalorder %s75, %s76
      %p90 = scmp.eq.s32.totalorder %s21, 1
      %p91 = por %p89, %p90
      %p93 = scmp.ne.s32.totalorder %s76, %s92
      %p94 = scmp.eq.s32.totalorder %s21, 0
      %p95 = por %p93, %p94
      %p96 = scmp.le.s32.totalorder 1, %s15
      %p97 = scmp.lt.s32.totalorder %s15, 3
      %p98 = pnand %p96, %p97
      %p99 = pneg %p98
      // Predicated region
      $region9: #{tpu_custom_call.1} parent=5 // pred_check
        _
      $region10: #{tpu_custom_call.1} parent=5 // pred_check_branch
        %101 = sbr.rel (%p98) target = $region12
      $region11: #{tpu_custom_call.1} parent=5 // pred_region
        %s102 = ssub.s32 %s15, 1
        // Predicated region
        $region13: #{tpu_custom_call.1} parent=11 // pred_check
          %p103 = pneg %p62
        $region14: #{tpu_custom_call.1} parent=11 // pred_check_branch
          %105 = sbr.rel (%p103) target = $region16
        $region15: #{tpu_custom_call.1} parent=11 // pred_region
          %s107 = ssub.s32 128, 128
          %108 = vsyncadd [#allocation7], %s107
          %s110 = sshll.u32 [#allocation6], 4
          %s111 = int_to_ptr.vmem [resolvable:$true] %s110
          %113 = dma.hbm_to_vmem [thread:$0]  %s1, 128, %s111, [#allocation7]
        $region16: #{tpu_custom_call.1} parent=11 // pred_fallthru
          _
      $region12: #{tpu_custom_call.1} parent=5 // pred_fallthru
        _
      %p114 = scmp.lt.s32.totalorder %s15, 2
      // Predicated region
      $region17: #{tpu_custom_call.1} parent=5 // pred_check
        %p115 = pneg %p114
      $region18: #{tpu_custom_call.1} parent=5 // pred_check_branch
        %117 = sbr.rel (%p115) target = $region20
      $region19: #{tpu_custom_call.1} parent=5 // pred_region
        // Predicated region
        $region21: #{tpu_custom_call.1} parent=19 // pred_check
          %p118 = pneg %p35
        $region22: #{tpu_custom_call.1} parent=19 // pred_check_branch
          %120 = sbr.rel (%p118) target = $region24
        $region23: #{tpu_custom_call.1} parent=19 // pred_region
          %s121 = sand.u32 %s25, 1
          %s122 = scalar_lea.sflag [#allocation4], %s121
          %s123 = sand.u32 %s25, 1
          %s124 = smul.addr %s123, 32
          %s125 = scalar_lea.vmem [#allocation3], %s124
          %s126 = smul.u32 2, %s15
          %s128 = ssub.s32 512, 512
          %129 = vsyncadd %s122, %s128
          %s130 = smul.addr %s126, 128
          %s131 = scalar_lea.hbm %s0, %s130
          %s132 = sshll.u32 %s125, 4
          %s133 = int_to_ptr.vmem [resolvable:$true] %s132
          %138 = dma.hbm_to_vmem [thread:$0]  %s131, 512, %s133, %s122, 512, 256, 16
        $region24: #{tpu_custom_call.1} parent=19 // pred_fallthru
          _
      $region20: #{tpu_custom_call.1} parent=5 // pred_fallthru
        _
      %p139 = scmp.le.s32.totalorder 1, %s15
      %p140 = scmp.lt.s32.totalorder %s15, 3
      %p141 = pnand %p139, %p140
      %p142 = pneg %p141
      // Predicated region
      $region25: #{tpu_custom_call.1} parent=5 // pred_check
        _
      $region26: #{tpu_custom_call.1} parent=5 // pred_check_branch
        %144 = sbr.rel (%p141) target = $region28
      $region27: #{tpu_custom_call.1} parent=5 // pred_region
        %s145 = ssub.s32 %s15, 1
        %s146 = sand.u32 %s28, 1
        %s147 = scalar_lea.sflag [#allocation4], %s146
        %s148 = sand.u32 %s28, 1
        %s149 = smul.addr %s148, 32
        %s150 = scalar_lea.vmem [#allocation3], %s149
        // Predicated region
        $region29: #{tpu_custom_call.1} parent=27 // pred_check
          %p151 = pneg %p41
        $region30: #{tpu_custom_call.1} parent=27 // pred_check_branch
          %153 = sbr.rel (%p151) target = $region32
        $region31: #{tpu_custom_call.1} parent=27 // pred_region
          %154 = dma.done %s147, 512
        $region32: #{tpu_custom_call.1} parent=27 // pred_fallthru
          _
        // Predicated region
        $region33: #{tpu_custom_call.1} parent=27 // pred_check
          %p155 = pneg %p62
        $region34: #{tpu_custom_call.1} parent=27 // pred_check_branch
          %157 = sbr.rel (%p155) target = $region36
        $region35: #{tpu_custom_call.1} parent=27 // pred_region
          %158 = dma.done [#allocation7], 128
        $region36: #{tpu_custom_call.1} parent=27 // pred_fallthru
          _
        %s159 = sand.u32 %s28, 1
        %s160 = scalar_lea.sflag [#allocation4], %s159
        %s161 = sand.u32 %s28, 1
        %s162 = smul.addr %s161, 32
        %s163 = scalar_lea.vmem [#allocation3], %s162
        %p164 = pneg %p41
        %p165 = pneg %p38
        %p166 = pneg %p62
        %p167 = pneg %p59
        %p168 = pneg %p88
        %p169 = pneg %p85
        %s170 = sand.u32 %s75, 1
        %s171 = scalar_lea.sflag [#allocation5], %s170
        %s172 = sand.u32 %s75, 1
        %s173 = smul.addr %s172, 8
        %s174 = scalar_lea.vmem [#allocation8], %s173
        %s175 = smul.u32 2, %s20
        %176 = vst [vmem:[#allocation2] sm:$0xff] 0.0
        %177 = vst [vmem:[#allocation2 + $0x8] sm:$0xff] 0.0
        %178 = vst [vmem:[#allocation2 + $0x10] sm:$0xff] 0.0
        %179 = vst [vmem:[#allocation2 + $0x18] sm:$0xff] 0.0
        %180 = vst [vmem:[#allocation2 + $0x20] sm:$0xff] 0.0
        %181 = vst [vmem:[#allocation2 + $0x28] sm:$0xff] 0.0
        %182 = vst [vmem:[#allocation2 + $0x30] sm:$0xff] 0.0
        %183 = vst [vmem:[#allocation2 + $0x38] sm:$0xff] 0.0
        %v184 = vld [vmem:[%s150] sm:$0xff]
        %v185 = vld [vmem:[%s150 + $0x10] sm:$0xf]
        %186 = vst [vmem:[#allocation2] sm:$0xff] %v184
        %187 = vst [vmem:[#allocation2 + $0x8] sm:$0xf] %v185
        %v188 = vld [vmem:[%s150] sm:$0xff]
        %v189 = vld [vmem:[%s150 + $0x8] sm:$0xff]
        %v190 = vld [vmem:[%s150 + $0x10] sm:$0xf]
        %v191 = vld [vmem:[%s150 + $0x18] sm:$0xf]
        %196 = vrot.lane.b32.xlu0 %v188, 127
        %v197 = vpop.permute.xlu0 %196
        %198 = vrot.lane.b32.xlu0 %v189, 127
        %v199 = vpop.permute.xlu0 %198
        %200 = vrot.lane.b32.xlu0 %v190, 127
        %v201 = vpop.permute.xlu0 %200
        %202 = vrot.lane.b32.xlu0 %v191, 127
        %v203 = vpop.permute.xlu0 %202
        %vm204 = vcmask 1039360
        %v205 = vsel %vm204, %v197, %v199
        %v206 = vsel %vm204, %v201, %v203
        %209 = vst [vmem:[#allocation2 + $0x10] sm:$0xff] %v205
        %210 = vst [vmem:[#allocation2 + $0x18] sm:$0xf] %v206
        %v211 = vld [vmem:[%s150] sm:$0xff]
        %v212 = vld [vmem:[%s150 + $0x8] sm:$0xff]
        %v213 = vld [vmem:[%s150 + $0x10] sm:$0xf]
        %v214 = vld [vmem:[%s150 + $0x18] sm:$0xf]
        %219 = vrot.lane.b32.xlu0 %v211, 119
        %v220 = vpop.permute.xlu0 %219
        %221 = vrot.lane.b32.xlu0 %v212, 119
        %v222 = vpop.permute.xlu0 %221
        %223 = vrot.lane.b32.xlu0 %v213, 119
        %v224 = vpop.permute.xlu0 %223
        %225 = vrot.lane.b32.xlu0 %v214, 119
        %v226 = vpop.permute.xlu0 %225
        %vm227 = vcmask 973824
        %v228 = vsel %vm227, %v220, %v222
        %v229 = vsel %vm227, %v224, %v226
        %232 = vst [vmem:[#allocation2 + $0x20] sm:$0xff] %v228
        %233 = vst [vmem:[#allocation2 + $0x28] sm:$0xf] %v229
        %v234 = vld [vmem:[%s150] sm:$0xff]
        %v235 = vld [vmem:[%s150 + $0x8] sm:$0xff]
        %v236 = vld [vmem:[%s150 + $0x10] sm:$0xf]
        %v237 = vld [vmem:[%s150 + $0x18] sm:$0xf]
        %242 = vrot.lane.b32.xlu0 %v234, 118
        %v243 = vpop.permute.xlu0 %242
        %244 = vrot.lane.b32.xlu0 %v235, 118
        %v245 = vpop.permute.xlu0 %244
        %246 = vrot.lane.b32.xlu0 %v236, 118
        %v247 = vpop.permute.xlu0 %246
        %248 = vrot.lane.b32.xlu0 %v237, 118
        %v249 = vpop.permute.xlu0 %248
        %vm250 = vcmask 965632
        %v251 = vsel %vm250, %v243, %v245
        %v252 = vsel %vm250, %v247, %v249
        %255 = vst [vmem:[#allocation2 + $0x30] sm:$0xff] %v251
        %256 = vst [vmem:[#allocation2 + $0x38] sm:$0xf] %v252
        %v257 = vld [vmem:[#allocation6] sm:$0xff]
        %v258 = vld [vmem:[#allocation2] sm:$0xff]
        %v259 = vld [vmem:[#allocation2 + $0x8] sm:$0xff]
        %v260 = vld [vmem:[#allocation2 + $0x10] sm:$0xff]
        %v261 = vld [vmem:[#allocation2 + $0x18] sm:$0xff]
        %v262 = vld [vmem:[#allocation2 + $0x20] sm:$0xff]
        %v263 = vld [vmem:[#allocation2 + $0x28] sm:$0xff]
        %v264 = vld [vmem:[#allocation2 + $0x30] sm:$0xff]
        %v265 = vld [vmem:[#allocation2 + $0x38] sm:$0xff]
        %vm266 = vcmask 523264
        %v268 = vsel %vm266, %v257, 0
        %270 = vmatprep.subr.mxu0 0.0
        %271 = vmatpush1.msra.mxu0 0.0
        %272 = vmatprep.subr.mxu0 0.0
        %273 = vmatpush1.msra.mxu0 0.0
        %274 = vmatprep.subr.mxu0 0.0
        %275 = vmatpush1.msra.mxu0 0.0
        %276 = vmatprep.subr.mxu0 0.0
        %277 = vmatpush1.msra.mxu0 0.0
        %278 = vmatprep.subr.mxu0 0.0
        %279 = vmatpush1.msra.mxu0 0.0
        %280 = vmatprep.subr.mxu0 0.0
        %281 = vmatpush1.msra.mxu0 0.0
        %282 = vmatprep.subr.mxu0 0.0
        %283 = vmatpush1.msra.mxu0 0.0
        %284 = vmatprep.subr.mxu0 0.0
        %285 = vmatpush1.msra.mxu0 0.0
        %286 = vmatprep.subr.mxu0 0.0
        %287 = vmatpush1.msra.mxu0 %v265
        %288 = vmatprep.subr.mxu0 0.0
        %289 = vmatpush1.msra.mxu0 %v264
        %290 = vmatprep.subr.mxu0 0.0
        %291 = vmatpush1.msra.mxu0 %v263
        %292 = vmatprep.subr.mxu0 0.0
        %293 = vmatpush1.msra.mxu0 %v262
        %294 = vmatprep.subr.mxu0 0.0
        %295 = vmatpush1.msra.mxu0 %v261
        %296 = vmatprep.subr.mxu0 0.0
        %297 = vmatpush1.msra.mxu0 %v260
        %298 = vmatprep.subr.mxu0 0.0
        %299 = vmatpush1.msra.mxu0 %v259
        %300 = vmatprep.subr.mxu0 0.0
        %301 = vmatpush1.msra.mxu0 %v258
        %302 = vmatprep.subr.mxu0 0.0
        %303 = vmatpush2.msra.mxu0 0.0
        %304 = vmatprep.subr.mxu0 0.0
        %305 = vmatpush2.msra.mxu0 0.0
        %306 = vmatprep.subr.mxu0 0.0
        %307 = vmatpush2.msra.mxu0 0.0
        %308 = vmatprep.subr.mxu0 0.0
        %309 = vmatpush2.msra.mxu0 0.0
        %310 = vmatprep.subr.mxu0 0.0
        %311 = vmatpush2.msra.mxu0 0.0
        %312 = vmatprep.subr.mxu0 0.0
        %313 = vmatpush2.msra.mxu0 0.0
        %314 = vmatprep.subr.mxu0 0.0
        %315 = vmatpush2.msra.mxu0 0.0
        %316 = vmatprep.subr.mxu0 0.0
        %317 = vmatpush2.msra.mxu0 0.0
        %318 = vmatprep.subr.mxu0 0.0
        %319 = vmatpush2.msra.mxu0 0.0
        %320 = vmatprep.subr.mxu0 0.0
        %321 = vmatpush2.msra.mxu0 0.0
        %322 = vmatprep.subr.mxu0 0.0
        %323 = vmatpush2.msra.mxu0 0.0
        %324 = vmatprep.subr.mxu0 0.0
        %325 = vmatpush2.msra.mxu0 0.0
        %326 = vmatprep.subr.mxu0 0.0
        %327 = vmatpush2.msra.mxu0 0.0
        %328 = vmatprep.subr.mxu0 0.0
        %329 = vmatpush2.msra.mxu0 0.0
        %330 = vmatprep.subr.mxu0 0.0
        %331 = vmatpush2.msra.mxu0 0.0
        %332 = vmatprep.subr.mxu0 0.0
        %333 = vmatpush2.msra.mxu0 0.0
        %334 = vmatprep.mubr.f32.mxu0 0.0
        %335 = vmatmul.mubr.f32.gmra.mxu0 %v268
        %v336 = vpop.f32.mrf.mxu0
        %v337 = vadd.f32 0.0, %v336
        %v338 = vpop.f32.mrf.mxu0
        %339 = vdwg.mxu0
        %340 = vst [vmem:[%s174] sm:$0xff] %v337
        %s341 = sand.u32 %s75, 1
        %s342 = scalar_lea.sflag [#allocation5], %s341
        %s343 = sand.u32 %s75, 1
        %s344 = smul.addr %s343, 8
        %s345 = scalar_lea.vmem [#allocation8], %s344
        // Predicated region
        $region37: #{tpu_custom_call.1} parent=27 // pred_check
          %p346 = pneg %p85
        $region38: #{tpu_custom_call.1} parent=27 // pred_check_branch
          %348 = sbr.rel (%p346) target = $region40
        $region39: #{tpu_custom_call.1} parent=27 // pred_region
          %s350 = ssub.s32 128, 128
          %351 = vsyncadd %s342, %s350
          %s352 = smul.addr %s20, 128
          %s353 = scalar_lea.hbm %s2, %s352
          %s355 = sshll.u32 %s345, 4
          %s356 = int_to_ptr.vmem [resolvable:$true] %s355
          %358 = dma.vmem_to_hbm [thread:$0]  %s356, 128, %s353, %s342
        $region40: #{tpu_custom_call.1} parent=27 // pred_fallthru
          _
      $region28: #{tpu_custom_call.1} parent=5 // pred_fallthru
        _
      %p359 = scmp.le.s32.totalorder 2, %s15
      // Predicated region
      $region41: #{tpu_custom_call.1} parent=5 // pred_check
        %p360 = pneg %p359
      $region42: #{tpu_custom_call.1} parent=5 // pred_check_branch
        %362 = sbr.rel (%p360) target = $region44
      $region43: #{tpu_custom_call.1} parent=5 // pred_region
        %s363 = ssub.s32 %s15, 2
        // Predicated region
        $region45: #{tpu_custom_call.1} parent=43 // pred_check
          %p364 = pneg %p91
        $region46: #{tpu_custom_call.1} parent=43 // pred_check_branch
          %366 = sbr.rel (%p364) target = $region48
        $region47: #{tpu_custom_call.1} parent=43 // pred_region
          %s367 = sand.u32 %s76, 1
          %s368 = scalar_lea.sflag [#allocation5], %s367
          %s369 = sand.u32 %s76, 1
          %s370 = smul.addr %s369, 8
          %s371 = scalar_lea.vmem [#allocation8], %s370
          %372 = dma.done %s368, 128
        $region48: #{tpu_custom_call.1} parent=43 // pred_fallthru
          _
      $region44: #{tpu_custom_call.1} parent=5 // pred_fallthru
        _
    $region6: #{tpu_custom_call.1} parent=1 // loop_footer
      %s19 = sadd.s32 1, %s15
    $region7: #{tpu_custom_call.1} parent=1 // loop_footer_branch
      %14 = sbr.rel target = $region3
    $region8: #{tpu_custom_call.1} parent=1 // loop_exit
      _
    %373 = vsyncpa [#allocation4], 1
    %s374 = scalar_lea.sflag [#allocation4], 1
    %375 = vsyncpa %s374, 1
    %376 = vsyncpa [#allocation7], 1
    %377 = vsyncpa [#allocation5], 1
    %s378 = scalar_lea.sflag [#allocation5], 1
    %379 = vsyncpa %s378, 1

</llo_original>
